<compile_context>
chip_gen: v5e
topology: v5e:2x2
jax: 0.10.0
libtpu: 0.0.40
codegen_flags: <defaults>
</compile_context>

<pallas_src>
import functools

import jax
import jax.numpy as jnp
import numpy as np
from jax.experimental import pallas as pl
from jax.experimental.pallas import tpu as pltpu


def _round_up(x, m):
    return ((x + m - 1) // m) * m


def _fused_lstm_kernel(x_ref, h0_ref, c0_ref, w_ref, b_ref,
                       h_out_ref, c_out_ref, xh_ref, *, xw, hp):
    """One grid step == one layer of the stacked LSTMCells.

    Block shapes (all lane-padded):
      x_ref     : (B, xw)           f32   layer-0 input (zero padded)
      h0_ref    : (B, hp)           f32   this layer's initial hidden state
      c0_ref    : (B, hp)           f32   this layer's initial cell state
      w_ref     : (xw + hp, 4*hp)   bf16  [W_ih^T ; W_hh^T] for this layer
      b_ref     : (1, 4*hp)         f32   b_ih + b_hh for this layer
      h_out_ref : (B, hp)           f32
      c_out_ref : (B, hp)           f32
      xh_ref    : (B, xw + hp)      bf16  scratch carrying [input_l, h0_l]
    """
    l = pl.program_id(0)
    cdt = xh_ref.dtype

    # Layer 0 input comes from x; later layers reuse the previous layer's h,
    # which was written into xh_ref[:, :xw] at the end of the previous step.
    @pl.when(l == 0)
    def _():
        xh_ref[:, :xw] = x_ref[...].astype(cdt)

    # This layer's own initial hidden state.
    xh_ref[:, xw:] = h0_ref[...].astype(cdt)

    # Single fused MXU matmul (bf16 operands, f32 accumulation) + f32 bias.
    gates = jnp.dot(xh_ref[...], w_ref[...],
                    preferred_element_type=jnp.float32)
    gates = gates + b_ref[...]

    # PyTorch gate order (i, f, g, o); slices are 128-lane aligned (hp % 128 == 0).
    i_g = jax.nn.sigmoid(gates[:, 0 * hp:1 * hp])
    f_g = jax.nn.sigmoid(gates[:, 1 * hp:2 * hp])
    g_g = jnp.tanh(gates[:, 2 * hp:3 * hp])
    o_g = jax.nn.sigmoid(gates[:, 3 * hp:4 * hp])

    c_new = f_g * c0_ref[...] + i_g * g_g
    h_new = o_g * jnp.tanh(c_new)

    h_out_ref[...] = h_new.astype(h_out_ref.dtype)
    c_out_ref[...] = c_new.astype(c_out_ref.dtype)

    # dropout(p, training=False) == identity (eval semantics).
    # TODO(synk): training-mode dropout mask between layers.
    @pl.when(l + 1 < pl.num_programs(0))
    def _():
        nxt = h_new
        if xw > hp:  # static; only when input_size > hidden_size
            nxt = jnp.concatenate(
                [h_new, jnp.zeros((h_new.shape[0], xw - hp), jnp.float32)],
                axis=-1)
        xh_ref[:, :xw] = nxt.astype(cdt)


def _forward(x, h0, c0, w_c, b_c, *, hidden_size, xw, hp):
    """Pad to lane-aligned shapes, run the fused kernel, slice back to H."""
    L, B, _ = h0.shape
    in_sz = x.shape[-1]

    # Zero-pad activations/states to 128-lane multiples.
    x_p = jnp.zeros((B, xw), jnp.float32).at[:, :in_sz].set(
        x.astype(jnp.float32))
    h_p = jnp.zeros((L, B, hp), jnp.float32).at[:, :, :hidden_size].set(
        h0.astype(jnp.float32))
    c_p = jnp.zeros((L, B, hp), jnp.float32).at[:, :, :hidden_size].set(
        c0.astype(jnp.float32))

    # Explicit scoped-VMEM budget: 2x double-buffered per-layer blocks + margin,
    # floored at 32 MiB, capped well under v7x's 64 MiB physical VMEM.
    w_blk = (xw + hp) * 4 * hp * w_c.dtype.itemsize
    act_blk = (B * xw + 2 * B * hp + 4 * hp) * 4
    out_blk = 2 * B * hp * 4
    work = B * 4 * hp * 4 * 6 + B * (xw + hp) * 2
    est = 2 * (w_blk + act_blk + out_blk) + work
    vmem_limit = int(min(48 * 1024 * 1024, max(32 * 1024 * 1024, 2 * est)))

    kernel = functools.partial(_fused_lstm_kernel, xw=xw, hp=hp)
    h_out, c_out = pl.pallas_call(
        kernel,
        out_shape=(jax.ShapeDtypeStruct((L, B, hp), jnp.float32),
                   jax.ShapeDtypeStruct((L, B, hp), jnp.float32)),
        grid=(L,),
        in_specs=[
            pl.BlockSpec((B, xw), lambda l: (0, 0)),                    # x (resident)
            pl.BlockSpec((None, B, hp), lambda l: (l, 0, 0)),           # hidden[l]
            pl.BlockSpec((None, B, hp), lambda l: (l, 0, 0)),           # cell[l]
            pl.BlockSpec((None, xw + hp, 4 * hp), lambda l: (l, 0, 0)),  # W[l]
            pl.BlockSpec((None, 1, 4 * hp), lambda l: (l, 0, 0)),        # b[l]
        ],
        out_specs=(
            pl.BlockSpec((None, B, hp), lambda l: (l, 0, 0)),
            pl.BlockSpec((None, B, hp), lambda l: (l, 0, 0)),
        ),
        scratch_shapes=[pltpu.VMEM((B, xw + hp), jnp.bfloat16)],
        # Write h/c back over the padded state buffers (no fresh HBM outputs).
        input_output_aliases={1: 0, 2: 1},
        compiler_params=pltpu.CompilerParams(
            dimension_semantics=("arbitrary",),  # layers are sequential
            vmem_limit_bytes=vmem_limit),
    )(x_p, h_p, c_p, w_c, b_c)

    return h_out[:, :, :hidden_size], c_out[:, :, :hidden_size]


class MultiLayerLSTMCellsPallas:
    """JAX/Pallas port of model/decoder.py::MultiLayerLSTMCells (forward, eval)."""

    def __init__(self, input_size, hidden_size, num_layers, dropout,
                 bias=True, key=None, param_dtype=jnp.bfloat16):
        self._input_size = int(input_size)
        self._hidden_size = int(hidden_size)
        self._num_layers = int(num_layers)
        self._dropout = dropout
        self._bias = bias
        self._param_dtype = param_dtype

        H = self._hidden_size
        self._hp = _round_up(H, 128)                               # padded H
        self._xw = _round_up(max(self._input_size, H), 128)        # padded x slot

        if key is None:
            key = jax.random.PRNGKey(0)
        bound = 1.0 / float(np.sqrt(H))

        # Unpadded f32 params (kept for the pure-JAX reference).
        self.params = []
        # Stacked, lane-padded, fused kernel params.
        w_c = np.zeros((num_layers, self._xw + self._hp, 4 * self._hp), np.float32)
        b_c = np.zeros((num_layers, 1, 4 * self._hp), np.float32)

        for layer in range(num_layers):
            in_sz = self._input_size if layer == 0 else H
            key, k1, k2, k3, k4 = jax.random.split(key, 5)
            # PyTorch stores W_ih as (4H, in); keep the transpose for x @ W.
            w_ih_t = jax.random.uniform(k1, (in_sz, 4 * H), jnp.float32, -bound, bound)
            w_hh_t = jax.random.uniform(k2, (H, 4 * H), jnp.float32, -bound, bound)
            if bias:
                b_ih = jax.random.uniform(k3, (4 * H,), jnp.float32, -bound, bound)
                b_hh = jax.random.uniform(k4, (4 * H,), jnp.float32, -bound, bound)
            else:
                b_ih = jnp.zeros((4 * H,), jnp.float32)
                b_hh = jnp.zeros((4 * H,), jnp.float32)
            # Combine biases in f32 (kept f32 in-kernel; never rounded to bf16).
            b = (b_ih + b_hh).reshape(1, 4 * H)
            self.params.append((w_ih_t, w_hh_t, b))

            w_ih_np = np.asarray(w_ih_t)
            w_hh_np = np.asarray(w_hh_t)
            b_np = np.asarray(b)[0]
            hp, xw = self._hp, self._xw
            for g in range(4):
                w_c[layer, :in_sz, g * hp:g * hp + H] = w_ih_np[:, g * H:(g + 1) * H]
                w_c[layer, xw:xw + H, g * hp:g * hp + H] = w_hh_np[:, g * H:(g + 1) * H]
                b_c[layer, 0, g * hp:g * hp + H] = b_np[g * H:(g + 1) * H]

        self.w_c = jnp.asarray(w_c).astype(param_dtype)   # (L, xw+hp, 4*hp) bf16
        self.b_c = jnp.asarray(b_c)                       # (L, 1, 4*hp)     f32

        self._fwd = jax.jit(functools.partial(
            _forward, hidden_size=H, xw=self._xw, hp=self._hp))

    def __call__(self, x, states):
        hidden, cell = states  # each (num_layers, B, H)
        return self._fwd(x, hidden, cell, self.w_c, self.b_c)

    @property
    def input_size(self):
        return self._input_size

    @property
    def hidden_size(self):
        return self._hidden_size

    @property
    def num_layers(self):
        return self._num_layers

    @property
    def bias(self):
        return self._bias


def _reference_forward(model, x, states):
    """Pure-JAX reference using identical bf16 weight/operand quantization."""
    hidden, cell = states
    H = model._hidden_size
    pdt = model._param_dtype
    out_h, out_c = [], []
    xin = x.astype(jnp.float32)
    for layer in range(model._num_layers):
        w_ih_t, w_hh_t, b = model.params[layer]
        w = jnp.concatenate([w_ih_t, w_hh_t], axis=0).astype(pdt).astype(jnp.float32)
        xh = jnp.concatenate([xin, hidden[layer].astype(jnp.float32)], axis=-1)
        xh = xh.astype(jnp.bfloat16).astype(jnp.float32)
        gates = xh @ w + b
        i = jax.nn.sigmoid(gates[:, :H])
        f = jax.nn.sigmoid(gates[:, H:2 * H])
        g = jnp.tanh(gates[:, 2 * H:3 * H])
        o = jax.nn.sigmoid(gates[:, 3 * H:])
        c = f * cell[layer].astype(jnp.float32) + i * g
        h = o * jnp.tanh(c)
        out_h.append(h)
        out_c.append(c)
        xin = h  # dropout(training=False) == identity
    return jnp.stack(out_h, 0), jnp.stack(out_c, 0)


if __name__ == "__main__":
    B = 8
    INPUT_SIZE = 32
    HIDDEN = 32
    NUM_LAYERS = 3
    DROPOUT = 0.0

    key = jax.random.PRNGKey(0)
    k_w, k_x, k_h, k_c = jax.random.split(key, 4)

    model = MultiLayerLSTMCellsPallas(INPUT_SIZE, HIDDEN, NUM_LAYERS, DROPOUT,
                                      bias=True, key=k_w)

    x = jax.random.normal(k_x, (B, INPUT_SIZE), jnp.float32)
    h0 = jax.random.normal(k_h, (NUM_LAYERS, B, HIDDEN), jnp.float32)
    c0 = jax.random.normal(k_c, (NUM_LAYERS, B, HIDDEN), jnp.float32)

    out_h, out_c = model(x, (h0, c0))
    out_h = jax.block_until_ready(out_h)
    out_c = jax.block_until_ready(out_c)

    ref_h, ref_c = _reference_forward(model, x, (h0, c0))
    assert out_h.shape == (NUM_LAYERS, B, HIDDEN)
    assert out_c.shape == (NUM_LAYERS, B, HIDDEN)
    assert jnp.allclose(out_h, ref_h, atol=2e-4, rtol=2e-4), \
        float(jnp.max(jnp.abs(out_h - ref_h)))
    assert jnp.allclose(out_c, ref_c, atol=2e-4, rtol=2e-4), \
        float(jnp.max(jnp.abs(out_c - ref_c)))

    print("KERNEL_OK")
</pallas_src>

<mosaic_0001>
module attributes {stable_mosaic.version = 11 : i64} {
  func.func @_fused_lstm_kernel(%arg0: i32, %arg1: memref<8x128xf32, #tpu.memory_space<vmem>>, %arg2: memref<1x8x128xf32, #tpu.memory_space<vmem>>, %arg3: memref<1x8x128xf32, #tpu.memory_space<vmem>>, %arg4: memref<1x256x512xbf16, #tpu.memory_space<vmem>>, %arg5: memref<1x1x512xf32, #tpu.memory_space<vmem>>, %arg6: memref<1x8x128xf32, #tpu.memory_space<vmem>>, %arg7: memref<1x8x128xf32, #tpu.memory_space<vmem>>, %arg8: memref<8x256xbf16, #tpu.memory_space<vmem>>) attributes {dimension_semantics = [#tpu.dimension_semantics<arbitrary>], iteration_bounds = array<i64: 3>, scalar_prefetch = 0 : i64, scratch_operands = 1 : i64, tpu.core_type = #tpu.core_type<tc>, window_params = [{pipeline_mode = #tpu.pipeline_mode<synchronous>, transform_indices = @transform_0, window_bounds = array<i64: 8, 128>}, {transform_indices = @transform_1, window_bounds = array<i64: 1, 8, 128>}, {transform_indices = @transform_2, window_bounds = array<i64: 1, 8, 128>}, {transform_indices = @transform_3, window_bounds = array<i64: 1, 256, 512>}, {transform_indices = @transform_4, window_bounds = array<i64: 1, 1, 512>}, {transform_indices = @transform_5, window_bounds = array<i64: 1, 8, 128>}, {transform_indices = @transform_6, window_bounds = array<i64: 1, 8, 128>}]} {
    %c0_i32 = arith.constant 0 : i32
    %0 = arith.cmpi eq, %arg0, %c0_i32 : i32
    %1 = arith.extui %0 : i1 to i32
    %c0_i32_0 = arith.constant 0 : i32
    %2 = arith.cmpi ne, %1, %c0_i32_0 : i32
    scf.if %2 {
      %c0_25 = arith.constant 0 : index
      %c0_26 = arith.constant 0 : index
      %52 = vector.load %arg1[%c0_25, %c0_26] : memref<8x128xf32, #tpu.memory_space<vmem>>, vector<8x128xf32>
      %53 = arith.truncf %52 : vector<8x128xf32> to vector<8x128xbf16>
      %c0_27 = arith.constant 0 : index
      %c0_28 = arith.constant 0 : index
      %54 = vector.load %arg8[%c0_27, %c0_28] : memref<8x256xbf16, #tpu.memory_space<vmem>>, vector<8x128xbf16>
      tpu.vector_store %arg8[%c0_27, %c0_28], %53 {strides = array<i32>} : memref<8x256xbf16, #tpu.memory_space<vmem>>, vector<8x128xbf16>,
    } else {
    }
    %c0 = arith.constant 0 : index
    %c0_1 = arith.constant 0 : index
    %c0_2 = arith.constant 0 : index
    %3 = vector.load %arg2[%c0, %c0_1, %c0_2] : memref<1x8x128xf32, #tpu.memory_space<vmem>>, vector<1x8x128xf32>
    %4 = vector.shape_cast %3 : vector<1x8x128xf32> to vector<8x128xf32>
    %5 = arith.truncf %4 : vector<8x128xf32> to vector<8x128xbf16>
    %c0_3 = arith.constant 0 : index
    %c128 = arith.constant 128 : index
    %6 = vector.load %arg8[%c0_3, %c128] : memref<8x256xbf16, #tpu.memory_space<vmem>>, vector<8x128xbf16>
    tpu.vector_store %arg8[%c0_3, %c128], %5 {strides = array<i32>} : memref<8x256xbf16, #tpu.memory_space<vmem>>, vector<8x128xbf16>,
    %c0_4 = arith.constant 0 : index
    %c0_5 = arith.constant 0 : index
    %7 = vector.load %arg8[%c0_4, %c0_5] : memref<8x256xbf16, #tpu.memory_space<vmem>>, vector<8x256xbf16>
    %c0_6 = arith.constant 0 : index
    %c0_7 = arith.constant 0 : index
    %c0_8 = arith.constant 0 : index
    %8 = vector.load %arg4[%c0_6, %c0_7, %c0_8] : memref<1x256x512xbf16, #tpu.memory_space<vmem>>, vector<1x256x512xbf16>
    %9 = vector.shape_cast %8 : vector<1x256x512xbf16> to vector<256x512xbf16>
    %cst = arith.constant dense<0.000000e+00> : vector<8x512xf32>
    %10 = tpu.matmul %7, %9, %cst {dimension_numbers = #tpu.dot_dimension_numbers<[1], [0], [0], [1], [0, 0, 1, 1], [], []>} : vector<8x256xbf16>, vector<256x512xbf16>, vector<8x512xf32> -> vector<8x512xf32>
    %c0_9 = arith.constant 0 : index
    %c0_10 = arith.constant 0 : index
    %c0_11 = arith.constant 0 : index
    %11 = vector.load %arg5[%c0_9, %c0_10, %c0_11] : memref<1x1x512xf32, #tpu.memory_space<vmem>>, vector<1x1x512xf32>
    %12 = vector.shape_cast %11 : vector<1x1x512xf32> to vector<1x512xf32>
    %13 = vector.broadcast %12 : vector<1x512xf32> to vector<8x512xf32>
    %14 = arith.addf %10, %13 : vector<8x512xf32>
    %15 = vector.extract_strided_slice %14 {offsets = [0, 0], sizes = [8, 128], strides = [1, 1]} : vector<8x512xf32> to vector<8x128xf32>
    %16 = arith.negf %15 : vector<8x128xf32>
    %17 = math.exp %16 : vector<8x128xf32>
    %cst_12 = arith.constant 1.000000e+00 : f32
    %18 = vector.broadcast %cst_12 : f32 to vector<8x128xf32>
    %19 = arith.addf %18, %17 : vector<8x128xf32>
    %20 = arith.divf %18, %19 : vector<8x128xf32>
    %21 = vector.extract_strided_slice %14 {offsets = [0, 128], sizes = [8, 128], strides = [1, 1]} : vector<8x512xf32> to vector<8x128xf32>
    %22 = arith.negf %21 : vector<8x128xf32>
    %23 = math.exp %22 : vector<8x128xf32>
    %cst_13 = arith.constant 1.000000e+00 : f32
    %24 = vector.broadcast %cst_13 : f32 to vector<8x128xf32>
    %25 = arith.addf %24, %23 : vector<8x128xf32>
    %26 = arith.divf %24, %25 : vector<8x128xf32>
    %27 = vector.extract_strided_slice %14 {offsets = [0, 256], sizes = [8, 128], strides = [1, 1]} : vector<8x512xf32> to vector<8x128xf32>
    %28 = math.tanh %27 : vector<8x128xf32>
    %29 = vector.extract_strided_slice %14 {offsets = [0, 384], sizes = [8, 128], strides = [1, 1]} : vector<8x512xf32> to vector<8x128xf32>
    %30 = arith.negf %29 : vector<8x128xf32>
    %31 = math.exp %30 : vector<8x128xf32>
    %cst_14 = arith.constant 1.000000e+00 : f32
    %32 = vector.broadcast %cst_14 : f32 to vector<8x128xf32>
    %33 = arith.addf %32, %31 : vector<8x128xf32>
    %34 = arith.divf %32, %33 : vector<8x128xf32>
    %c0_15 = arith.constant 0 : index
    %c0_16 = arith.constant 0 : index
    %c0_17 = arith.constant 0 : index
    %35 = vector.load %arg3[%c0_15, %c0_16, %c0_17] : memref<1x8x128xf32, #tpu.memory_space<vmem>>, vector<1x8x128xf32>
    %36 = vector.shape_cast %35 : vector<1x8x128xf32> to vector<8x128xf32>
    %37 = arith.mulf %26, %36 : vector<8x128xf32>
    %38 = arith.mulf %20, %28 : vector<8x128xf32>
    %39 = arith.addf %37, %38 : vector<8x128xf32>
    %40 = math.tanh %39 : vector<8x128xf32>
    %41 = arith.mulf %34, %40 : vector<8x128xf32>
    %c0_18 = arith.constant 0 : index
    %c0_19 = arith.constant 0 : index
    %c0_20 = arith.constant 0 : index
    %42 = vector.load %arg6[%c0_18, %c0_19, %c0_20] : memref<1x8x128xf32, #tpu.memory_space<vmem>>, vector<1x8x128xf32>
    %43 = vector.shape_cast %42 : vector<1x8x128xf32> to vector<8x128xf32>
    %44 = vector.shape_cast %41 : vector<8x128xf32> to vector<1x8x128xf32>
    tpu.vector_store %arg6[%c0_18, %c0_19, %c0_20], %44 {strides = array<i32>} : memref<1x8x128xf32, #tpu.memory_space<vmem>>, vector<1x8x128xf32>,
    %c0_21 = arith.constant 0 : index
    %c0_22 = arith.constant 0 : index
    %c0_23 = arith.constant 0 : index
    %45 = vector.load %arg7[%c0_21, %c0_22, %c0_23] : memref<1x8x128xf32, #tpu.memory_space<vmem>>, vector<1x8x128xf32>
    %46 = vector.shape_cast %45 : vector<1x8x128xf32> to vector<8x128xf32>
    %47 = vector.shape_cast %39 : vector<8x128xf32> to vector<1x8x128xf32>
    tpu.vector_store %arg7[%c0_21, %c0_22, %c0_23], %47 {strides = array<i32>} : memref<1x8x128xf32, #tpu.memory_space<vmem>>, vector<1x8x128xf32>,
    %c1_i32 = arith.constant 1 : i32
    %48 = arith.addi %arg0, %c1_i32 : i32
    %c3_i32 = arith.constant 3 : i32
    %49 = arith.cmpi slt, %48, %c3_i32 : i32
    %50 = arith.extui %49 : i1 to i32
    %c0_i32_24 = arith.constant 0 : i32
    %51 = arith.cmpi ne, %50, %c0_i32_24 : i32
    scf.if %51 {
      %52 = arith.truncf %41 : vector<8x128xf32> to vector<8x128xbf16>
      %c0_25 = arith.constant 0 : index
      %c0_26 = arith.constant 0 : index
      %53 = vector.load %arg8[%c0_25, %c0_26] : memref<8x256xbf16, #tpu.memory_space<vmem>>, vector<8x128xbf16>
      tpu.vector_store %arg8[%c0_25, %c0_26], %52 {strides = array<i32>} : memref<8x256xbf16, #tpu.memory_space<vmem>>, vector<8x128xbf16>,
    } else {
    }
    return
  }
  func.func @transform_0(%arg0: i32) -> (i32, i32) {
    %c0_i32 = arith.constant 0 : i32
    %c0_i32_0 = arith.constant 0 : i32
    %c0_i32_1 = arith.constant 0 : i32
    return %c0_i32, %c0_i32_0 : i32, i32
  }
  func.func @transform_1(%arg0: i32) -> (i32, i32, i32) {
    %c0_i32 = arith.constant 0 : i32
    %c0_i32_0 = arith.constant 0 : i32
    %c0_i32_1 = arith.constant 0 : i32
    return %arg0, %c0_i32, %c0_i32_0 : i32, i32, i32
  }
  func.func @transform_2(%arg0: i32) -> (i32, i32, i32) {
    %c0_i32 = arith.constant 0 : i32
    %c0_i32_0 = arith.constant 0 : i32
    %c0_i32_1 = arith.constant 0 : i32
    return %arg0, %c0_i32, %c0_i32_0 : i32, i32, i32
  }
  func.func @transform_3(%arg0: i32) -> (i32, i32, i32) {
    %c0_i32 = arith.constant 0 : i32
    %c0_i32_0 = arith.constant 0 : i32
    %c0_i32_1 = arith.constant 0 : i32
    return %arg0, %c0_i32, %c0_i32_0 : i32, i32, i32
  }
  func.func @transform_4(%arg0: i32) -> (i32, i32, i32) {
    %c0_i32 = arith.constant 0 : i32
    %c0_i32_0 = arith.constant 0 : i32
    %c0_i32_1 = arith.constant 0 : i32
    return %arg0, %c0_i32, %c0_i32_0 : i32, i32, i32
  }
  func.func @transform_5(%arg0: i32) -> (i32, i32, i32) {
    %c0_i32 = arith.constant 0 : i32
    %c0_i32_0 = arith.constant 0 : i32
    %c0_i32_1 = arith.constant 0 : i32
    return %arg0, %c0_i32, %c0_i32_0 : i32, i32, i32
  }
  func.func @transform_6(%arg0: i32) -> (i32, i32, i32) {
    %c0_i32 = arith.constant 0 : i32
    %c0_i32_0 = arith.constant 0 : i32
    %c0_i32_1 = arith.constant 0 : i32
    return %arg0, %c0_i32, %c0_i32_0 : i32, i32, i32
  }
}

</mosaic_0001>

<llo_original>
// kernel: _forward.1
$region0: #{_forward.1}
  #allocation0 [shape = 'u32[]', space=smem, size = 0x4, offset = 0x4, fixed_abs, tag = 'smem constant byte address 0x4 - core index']
  #allocation1 [shape = 'u32[72,128]{1,0:T(1,128)}', space=vmem, size = 0x9000, scoped, tag = 'internal scratch']
  #allocation2 [shape = 'bf16[8,256]{1,0:T(8,128)(2,1)}', space=vmem, size = 0x1000, scoped, tag = 'scratch operand']
  %s0 = inlined_call_operand.vmem [shape: f32[8,128], index: 0, kind: input, shape index: {}]
  %s1 = inlined_call_operand.vmem [shape: f32[3,8,128], index: 1, kind: input, shape index: {}, may-alias: {1,5}]
  %s2 = inlined_call_operand.vmem [shape: f32[3,8,128], index: 2, kind: input, shape index: {}, may-alias: {2,6}]
  %s3 = inlined_call_operand.hbm [shape: bf16[3,256,512], index: 3, kind: input, shape index: {}]
  %s4 = inlined_call_operand.vmem [shape: f32[3,1,512], index: 4, kind: input, shape index: {}]
  %s5 = inlined_call_operand.vmem [shape: f32[3,8,128], index: 5, kind: output, shape index: {0}, may-alias: {1,5}]
  %s6 = inlined_call_operand.vmem [shape: f32[3,8,128], index: 6, kind: output, shape index: {1}, may-alias: {2,6}]
  %7 = xla_tuple %s5, %s6
  %s8 = sld [smem:[#allocation0]]
  $region73: #{_forward.1} parent=0
    _
  %s10 = ssub.s32 1, %s8
  %s11 = scalar_select 0, %s10, %s8
  $region1: #{_forward.1} parent=0
    #allocation3 [shape = 'u8[524288]{0}', space=vmem, size = 0x80000, scoped, tag = 'input window, operand 3']
    #allocation4 [shape = 's32[2]{0}', space=sflag, size = 0x8, scoped, tag = 'scoped memory for _forward.1']
    %12 = vsyncpa [#allocation4], 0
    %s13 = scalar_lea.sflag [#allocation4], 1
    %14 = vsyncpa %s13, 0
    loop: start=0, step=1, limit=5
    $region2: #{_forward.1} parent=1 // loop_pre_header
      _
    $region3: #{_forward.1} parent=1 // loop_header
      %s16 = sphi 0, %s20
      %p17 = scmp.ge.s32.totalorder %s16, 5
      %s24 = sphi 0, %s24
      %s26 = sphi 0, %s24
      %s27 = sphi 0, %s26
      %s41 = sphi 0, %s27
      %s47 = sphi 0, %s49
      %s50 = sphi 0, %s47
      %s51 = sphi 0, %s50
      %s67 = sphi 0, %s51
      %s73 = sphi 0, %s75
      %s76 = sphi 0, %s73
      %s77 = sphi 0, %s76
      %s93 = sphi 0, %s77
      %s99 = sphi 0, %s101
      %s102 = sphi 0, %s99
      %s103 = sphi 0, %s102
      %s119 = sphi 0, %s103
      %s125 = sphi 0, %s127
      %s128 = sphi 0, %s125
      %s129 = sphi 0, %s128
      %s145 = sphi 0, %s129
      %s151 = sphi 0, %s153
      %s154 = sphi 0, %s151
      %s155 = sphi 0, %s154
      %s171 = sphi 0, %s155
      %s177 = sphi 0, %s179
      %s180 = sphi 0, %s177
      %s181 = sphi 0, %s180
      %s197 = sphi 0, %s181
    $region4: #{_forward.1} parent=1 // loop_header_branch
      %19 = sbr.rel (%p17) target = $region8
    $region5: #{_forward.1} parent=1 // loop_body
      %s21 = ssub.s32 %s16, 1
      %s22 = ssub.s32 %s16, 2
      %s23 = sadd.s32 %s16, 1
      %s25 = sadd.s32 %s24, 1
      %p28 = scmp.eq.s32.totalorder %s16, 2
      %p29 = scmp.ne.s32.totalorder %s24, %s26
      %p30 = scmp.eq.s32.totalorder %s16, 0
      %p31 = por %p29, %p30
      %p32 = scmp.ne.s32.totalorder %s24, %s26
      %p33 = scmp.eq.s32.totalorder %s21, 2
      %p34 = por %p32, %p33
      %p35 = scmp.ne.s32.totalorder %s26, %s27
      %p36 = scmp.eq.s32.totalorder %s21, 0
      %p37 = por %p35, %p36
      %p38 = scmp.ne.s32.totalorder %s26, %s27
      %p39 = scmp.eq.s32.totalorder %s22, 2
      %p40 = por %p38, %p39
      %p42 = scmp.ne.s32.totalorder %s27, %s41
      %p43 = scmp.eq.s32.totalorder %s22, 0
      %p44 = por %p42, %p43
      %s45 = ssub.s32 %s16, %s23
      %p46 = scmp.eq.s32.totalorder %s45, 0
      %s48 = sadd.s32 %s47, 1
      %s49 = scalar_select %p46, %s47, %s48
      %p52 = pneg %p46
      %p53 = scmp.eq.s32.totalorder %s16, 2
      %p54 = por %p52, %p53
      %p55 = scmp.ne.s32.totalorder %s47, %s50
      %p56 = scmp.eq.s32.totalorder %s16, 0
      %p57 = por %p55, %p56
      %p58 = scmp.ne.s32.totalorder %s47, %s50
      %p59 = scmp.eq.s32.totalorder %s21, 2
      %p60 = por %p58, %p59
      %p61 = scmp.ne.s32.totalorder %s50, %s51
      %p62 = scmp.eq.s32.totalorder %s21, 0
      %p63 = por %p61, %p62
      %p64 = scmp.ne.s32.totalorder %s50, %s51
      %p65 = scmp.eq.s32.totalorder %s22, 2
      %p66 = por %p64, %p65
      %p68 = scmp.ne.s32.totalorder %s51, %s67
      %p69 = scmp.eq.s32.totalorder %s22, 0
      %p70 = por %p68, %p69
      %s71 = ssub.s32 %s16, %s23
      %p72 = scmp.eq.s32.totalorder %s71, 0
      %s74 = sadd.s32 %s73, 1
      %s75 = scalar_select %p72, %s73, %s74
      %p78 = pneg %p72
      %p79 = scmp.eq.s32.totalorder %s16, 2
      %p80 = por %p78, %p79
      %p81 = scmp.ne.s32.totalorder %s73, %s76
      %p82 = scmp.eq.s32.totalorder %s16, 0
      %p83 = por %p81, %p82
      %p84 = scmp.ne.s32.totalorder %s73, %s76
      %p85 = scmp.eq.s32.totalorder %s21, 2
      %p86 = por %p84, %p85
      %p87 = scmp.ne.s32.totalorder %s76, %s77
      %p88 = scmp.eq.s32.totalorder %s21, 0
      %p89 = por %p87, %p88
      %p90 = scmp.ne.s32.totalorder %s76, %s77
      %p91 = scmp.eq.s32.totalorder %s22, 2
      %p92 = por %p90, %p91
      %p94 = scmp.ne.s32.totalorder %s77, %s93
      %p95 = scmp.eq.s32.totalorder %s22, 0
      %p96 = por %p94, %p95
      %s97 = ssub.s32 %s16, %s23
      %p98 = scmp.eq.s32.totalorder %s97, 0
      %s100 = sadd.s32 %s99, 1
      %s101 = scalar_select %p98, %s99, %s100
      %p104 = pneg %p98
      %p105 = scmp.eq.s32.totalorder %s16, 2
      %p106 = por %p104, %p105
      %p107 = scmp.ne.s32.totalorder %s99, %s102
      %p108 = scmp.eq.s32.totalorder %s16, 0
      %p109 = por %p107, %p108
      %p110 = scmp.ne.s32.totalorder %s99, %s102
      %p111 = scmp.eq.s32.totalorder %s21, 2
      %p112 = por %p110, %p111
      %p113 = scmp.ne.s32.totalorder %s102, %s103
      %p114 = scmp.eq.s32.totalorder %s21, 0
      %p115 = por %p113, %p114
      %p116 = scmp.ne.s32.totalorder %s102, %s103
      %p117 = scmp.eq.s32.totalorder %s22, 2
      %p118 = por %p116, %p117
      %p120 = scmp.ne.s32.totalorder %s103, %s119
      %p121 = scmp.eq.s32.totalorder %s22, 0
      %p122 = por %p120, %p121
      %s123 = ssub.s32 %s16, %s23
      %p124 = scmp.eq.s32.totalorder %s123, 0
      %s126 = sadd.s32 %s125, 1
      %s127 = scalar_select %p124, %s125, %s126
      %p130 = pneg %p124
      %p131 = scmp.eq.s32.totalorder %s16, 2
      %p132 = por %p130, %p131
      %p133 = scmp.ne.s32.totalorder %s125, %s128
      %p134 = scmp.eq.s32.totalorder %s16, 0
      %p135 = por %p133, %p134
      %p136 = scmp.ne.s32.totalorder %s125, %s128
      %p137 = scmp.eq.s32.totalorder %s21, 2
      %p138 = por %p136, %p137
      %p139 = scmp.ne.s32.totalorder %s128, %s129
      %p140 = scmp.eq.s32.totalorder %s21, 0
      %p141 = por %p139, %p140
      %p142 = scmp.ne.s32.totalorder %s128, %s129
      %p143 = scmp.eq.s32.totalorder %s22, 2
      %p144 = por %p142, %p143
      %p146 = scmp.ne.s32.totalorder %s129, %s145
      %p147 = scmp.eq.s32.totalorder %s22, 0
      %p148 = por %p146, %p147
      %s149 = ssub.s32 %s16, %s23
      %p150 = scmp.eq.s32.totalorder %s149, 0
      %s152 = sadd.s32 %s151, 1
      %s153 = scalar_select %p150, %s151, %s152
      %p156 = pneg %p150
      %p157 = scmp.eq.s32.totalorder %s16, 2
      %p158 = por %p156, %p157
      %p159 = scmp.ne.s32.totalorder %s151, %s154
      %p160 = scmp.eq.s32.totalorder %s16, 0
      %p161 = por %p159, %p160
      %p162 = scmp.ne.s32.totalorder %s151, %s154
      %p163 = scmp.eq.s32.totalorder %s21, 2
      %p164 = por %p162, %p163
      %p165 = scmp.ne.s32.totalorder %s154, %s155
      %p166 = scmp.eq.s32.totalorder %s21, 0
      %p167 = por %p165, %p166
      %p168 = scmp.ne.s32.totalorder %s154, %s155
      %p169 = scmp.eq.s32.totalorder %s22, 2
      %p170 = por %p168, %p169
      %p172 = scmp.ne.s32.totalorder %s155, %s171
      %p173 = scmp.eq.s32.totalorder %s22, 0
      %p174 = por %p172, %p173
      %s175 = ssub.s32 %s16, %s23
      %p176 = scmp.eq.s32.totalorder %s175, 0
      %s178 = sadd.s32 %s177, 1
      %s179 = scalar_select %p176, %s177, %s178
      %p182 = pneg %p176
      %p183 = scmp.eq.s32.totalorder %s16, 2
      %p184 = por %p182, %p183
      %p185 = scmp.ne.s32.totalorder %s177, %s180
      %p186 = scmp.eq.s32.totalorder %s16, 0
      %p187 = por %p185, %p186
      %p188 = scmp.ne.s32.totalorder %s177, %s180
      %p189 = scmp.eq.s32.totalorder %s21, 2
      %p190 = por %p188, %p189
      %p191 = scmp.ne.s32.totalorder %s180, %s181
      %p192 = scmp.eq.s32.totalorder %s21, 0
      %p193 = por %p191, %p192
      %p194 = scmp.ne.s32.totalorder %s180, %s181
      %p195 = scmp.eq.s32.totalorder %s22, 2
      %p196 = por %p194, %p195
      %p198 = scmp.ne.s32.totalorder %s181, %s197
      %p199 = scmp.eq.s32.totalorder %s22, 0
      %p200 = por %p198, %p199
      %p201 = scmp.le.s32.totalorder 1, %s16
      %p202 = scmp.lt.s32.totalorder %s16, 4
      %p203 = pnand %p201, %p202
      %p204 = pneg %p203
      // Predicated region
      $region9: #{_forward.1} parent=5 // pred_check
        _
      $region10: #{_forward.1} parent=5 // pred_check_branch
        %206 = sbr.rel (%p203) target = $region12
      $region11: #{_forward.1} parent=5 // pred_region
        %s207 = ssub.s32 %s16, 1
        // Predicated region
        $region13: #{_forward.1} parent=11 // pred_check
          %p208 = pneg %p37
        $region14: #{_forward.1} parent=11 // pred_check_branch
          %210 = sbr.rel (%p208) target = $region16
        $region15: #{_forward.1} parent=11 // pred_region
          _
        $region16: #{_forward.1} parent=11 // pred_fallthru
          _
      $region12: #{_forward.1} parent=5 // pred_fallthru
        _
      %p211 = scmp.lt.s32.totalorder %s16, 3
      // Predicated region
      $region17: #{_forward.1} parent=5 // pred_check
        %p212 = pneg %p211
      $region18: #{_forward.1} parent=5 // pred_check_branch
        %214 = sbr.rel (%p212) target = $region20
      $region19: #{_forward.1} parent=5 // pred_region
        // Predicated region
        $region21: #{_forward.1} parent=19 // pred_check
          %p215 = pneg %p57
        $region22: #{_forward.1} parent=19 // pred_check_branch
          %217 = sbr.rel (%p215) target = $region24
        $region23: #{_forward.1} parent=19 // pred_region
          %p218 = scmp.lt.s32.totalorder %s16, 2
          %s219 = scalar_select %p218, %s16, 2
          %s220 = smul.addr %s219, 8
          %s221 = scalar_lea.vmem %s1, %s220
        $region24: #{_forward.1} parent=19 // pred_fallthru
          _
        // Predicated region
        $region25: #{_forward.1} parent=19 // pred_check
          %p222 = pneg %p83
        $region26: #{_forward.1} parent=19 // pred_check_branch
          %224 = sbr.rel (%p222) target = $region28
        $region27: #{_forward.1} parent=19 // pred_region
          %p225 = scmp.lt.s32.totalorder %s16, 2
          %s226 = scalar_select %p225, %s16, 2
          %s227 = smul.addr %s226, 8
          %s228 = scalar_lea.vmem %s2, %s227
        $region28: #{_forward.1} parent=19 // pred_fallthru
          _
        // Predicated region
        $region29: #{_forward.1} parent=19 // pred_check
          %p229 = pneg %p109
        $region30: #{_forward.1} parent=19 // pred_check_branch
          %231 = sbr.rel (%p229) target = $region32
        $region31: #{_forward.1} parent=19 // pred_region
          %s232 = sand.u32 %s99, 1
          %s233 = scalar_lea.sflag [#allocation4], %s232
          %s234 = sand.u32 %s99, 1
          %s235 = smul.addr %s234, 512
          %s236 = scalar_lea.vmem [#allocation3], %s235
          %238 = vsyncadd %s233, 0
          %s239 = smul.addr %s16, 128
          %s240 = smul.addr %s239, 4
          %s241 = scalar_lea.hbm %s3, %s240
          %s242 = sshll.u32 %s241, 4
          %s243 = int_to_ptr.hbm [resolvable:$true] %s242
          %s244 = sshll.u32 %s236, 4
          %s245 = int_to_ptr.vmem [resolvable:$true] %s244
          %250 = dma.hbm_to_vmem [thread:$0]  %s243, 8192, %s245, %s233, 256, 256, 16
        $region32: #{_forward.1} parent=19 // pred_fallthru
          _
        // Predicated region
        $region33: #{_forward.1} parent=19 // pred_check
          %p251 = pneg %p135
        $region34: #{_forward.1} parent=19 // pred_check_branch
          %253 = sbr.rel (%p251) target = $region36
        $region35: #{_forward.1} parent=19 // pred_region
          %p254 = scmp.lt.s32.totalorder %s16, 2
          %s255 = scalar_select %p254, %s16, 2
          %s256 = smul.addr %s255, 4
          %s257 = scalar_lea.vmem %s4, %s256
        $region36: #{_forward.1} parent=19 // pred_fallthru
          _
      $region20: #{_forward.1} parent=5 // pred_fallthru
        _
      %p258 = scmp.le.s32.totalorder 1, %s16
      %p259 = scmp.lt.s32.totalorder %s16, 4
      %p260 = pnand %p258, %p259
      %p261 = pneg %p260
      // Predicated region
      $region37: #{_forward.1} parent=5 // pred_check
        _
      $region38: #{_forward.1} parent=5 // pred_check_branch
        %263 = sbr.rel (%p260) target = $region40
      $region39: #{_forward.1} parent=5 // pred_region
        %s264 = ssub.s32 %s16, 1
        %s265 = sand.u32 %s102, 1
        %s266 = scalar_lea.sflag [#allocation4], %s265
        %s267 = sand.u32 %s102, 1
        %s268 = smul.addr %s267, 512
        %s269 = scalar_lea.vmem [#allocation3], %s268
        // Predicated region
        $region41: #{_forward.1} parent=39 // pred_check
          %p270 = pneg %p115
        $region42: #{_forward.1} parent=39 // pred_check_branch
          %272 = sbr.rel (%p270) target = $region44
        $region43: #{_forward.1} parent=39 // pred_region
          %274 = dma.done %s266, 8192
        $region44: #{_forward.1} parent=39 // pred_fallthru
          _
        %p275 = pneg %p37
        %p276 = pneg %p34
        %p277 = scmp.lt.s32.totalorder %s21, 2
        %s278 = scalar_select %p277, %s21, 2
        %s279 = smul.addr %s278, 8
        %s280 = scalar_lea.vmem %s1, %s279
        %p281 = pneg %p63
        %p282 = pneg %p60
        %p283 = scmp.lt.s32.totalorder %s21, 2
        %s284 = scalar_select %p283, %s21, 2
        %s285 = smul.addr %s284, 8
        %s286 = scalar_lea.vmem %s2, %s285
        %p287 = pneg %p89
        %p288 = pneg %p86
        %s289 = sand.u32 %s102, 1
        %s290 = scalar_lea.sflag [#allocation4], %s289
        %s291 = sand.u32 %s102, 1
        %s292 = smul.addr %s291, 512
        %s293 = scalar_lea.vmem [#allocation3], %s292
        %p294 = pneg %p115
        %p295 = pneg %p112
        %p296 = scmp.lt.s32.totalorder %s21, 2
        %s297 = scalar_select %p296, %s21, 2
        %s298 = smul.addr %s297, 4
        %s299 = scalar_lea.vmem %s4, %s298
        %p300 = pneg %p141
        %p301 = pneg %p138
        %p302 = pneg %p167
        %p303 = pneg %p164
        %p304 = scmp.lt.s32.totalorder %s21, 2
        %s305 = scalar_select %p304, %s21, 2
        %s306 = smul.addr %s305, 8
        %s307 = scalar_lea.vmem %s5, %s306
        %p308 = pneg %p193
        %p309 = pneg %p190
        %p310 = scmp.lt.s32.totalorder %s21, 2
        %s311 = scalar_select %p310, %s21, 2
        %s312 = smul.addr %s311, 8
        %s313 = scalar_lea.vmem %s6, %s312
        %p314 = scmp.lt.s32.totalorder %s21, 2
        %s315 = scalar_select %p314, %s21, 2
        %s316 = smul.addr %s315, 8
        %s317 = scalar_lea.vmem %s1, %s316
        %p318 = scmp.lt.s32.totalorder %s21, 2
        %s319 = scalar_select %p318, %s21, 2
        %s320 = smul.addr %s319, 8
        %s321 = scalar_lea.vmem %s2, %s320
        %p322 = scmp.lt.s32.totalorder %s21, 2
        %s323 = scalar_select %p322, %s21, 2
        %s324 = smul.addr %s323, 4
        %s325 = scalar_lea.vmem %s4, %s324
        %p326 = scmp.lt.s32.totalorder %s21, 2
        %s327 = scalar_select %p326, %s21, 2
        %s328 = smul.addr %s327, 8
        %s329 = scalar_lea.vmem %s5, %s328
        %p330 = scmp.lt.s32.totalorder %s21, 2
        %s331 = scalar_select %p330, %s21, 2
        %s332 = smul.addr %s331, 8
        %s333 = scalar_lea.vmem %s6, %s332
        %p334 = scmp.eq.s32.totalorder %s21, 0
        // Predicated region
        $region45: #{_forward.1} parent=39 // pred_check
          %p335 = pneg %p334
        $region46: #{_forward.1} parent=39 // pred_check_branch
          %337 = sbr.rel (%p335) target = $region48
        $region47: #{_forward.1} parent=39 // pred_region
          %v338 = vld [vmem:[%s0] sm:$0xff]
          %v339 = vpack.c.bf16 %v338, %v338
          %340 = vst [vmem:[#allocation2] sm:$0xf] %v339
        $region48: #{_forward.1} parent=39 // pred_fallthru
          _
        %v341 = vld [vmem:[%s317] sm:$0xff]
        %v342 = vpack.c.bf16 %v341, %v341
        %343 = vst [vmem:[#allocation2 + $0x4] sm:$0xf] %v342
        %v344 = vld [vmem:[#allocation2] sm:$0xff]
        %v345 = vld [vmem:[%s269] sm:$0xff]
        %v346 = vld [vmem:[%s269 + $0x8] sm:$0xff]
        %v347 = vld [vmem:[%s269 + $0x10] sm:$0xff]
        %v348 = vld [vmem:[%s269 + $0x18] sm:$0xff]
        %v349 = vld [vmem:[%s269 + $0x20] sm:$0xff]
        %v350 = vld [vmem:[%s269 + $0x28] sm:$0xff]
        %v351 = vld [vmem:[%s269 + $0x30] sm:$0xff]
        %v352 = vld [vmem:[%s269 + $0x38] sm:$0xff]
        %v353 = vld [vmem:[%s269 + $0x40] sm:$0xff]
        %v354 = vld [vmem:[%s269 + $0x48] sm:$0xff]
        %v355 = vld [vmem:[%s269 + $0x50] sm:$0xff]
        %v356 = vld [vmem:[%s269 + $0x58] sm:$0xff]
        %v357 = vld [vmem:[%s269 + $0x60] sm:$0xff]
        %v358 = vld [vmem:[%s269 + $0x68] sm:$0xff]
        %v359 = vld [vmem:[%s269 + $0x70] sm:$0xff]
        %v360 = vld [vmem:[%s269 + $0x78] sm:$0xff]
        %v361 = vld [vmem:[%s269 + $0x80] sm:$0xff]
        %v362 = vld [vmem:[%s269 + $0x88] sm:$0xff]
        %v363 = vld [vmem:[%s269 + $0x90] sm:$0xff]
        %v364 = vld [vmem:[%s269 + $0x98] sm:$0xff]
        %v365 = vld [vmem:[%s269 + $0xa0] sm:$0xff]
        %v366 = vld [vmem:[%s269 + $0xa8] sm:$0xff]
        %v367 = vld [vmem:[%s269 + $0xb0] sm:$0xff]
        %v368 = vld [vmem:[%s269 + $0xb8] sm:$0xff]
        %v369 = vld [vmem:[%s269 + $0xc0] sm:$0xff]
        %v370 = vld [vmem:[%s269 + $0xc8] sm:$0xff]
        %v371 = vld [vmem:[%s269 + $0xd0] sm:$0xff]
        %v372 = vld [vmem:[%s269 + $0xd8] sm:$0xff]
        %v373 = vld [vmem:[%s269 + $0xe0] sm:$0xff]
        %v374 = vld [vmem:[%s269 + $0xe8] sm:$0xff]
        %v375 = vld [vmem:[%s269 + $0xf0] sm:$0xff]
        %v376 = vld [vmem:[%s269 + $0xf8] sm:$0xff]
        %v377 = vld [vmem:[%s269 + $0x100] sm:$0xff]
        %v378 = vld [vmem:[%s269 + $0x108] sm:$0xff]
        %v379 = vld [vmem:[%s269 + $0x110] sm:$0xff]
        %v380 = vld [vmem:[%s269 + $0x118] sm:$0xff]
        %v381 = vld [vmem:[%s269 + $0x120] sm:$0xff]
        %v382 = vld [vmem:[%s269 + $0x128] sm:$0xff]
        %v383 = vld [vmem:[%s269 + $0x130] sm:$0xff]
        %v384 = vld [vmem:[%s269 + $0x138] sm:$0xff]
        %v385 = vld [vmem:[%s269 + $0x140] sm:$0xff]
        %v386 = vld [vmem:[%s269 + $0x148] sm:$0xff]
        %v387 = vld [vmem:[%s269 + $0x150] sm:$0xff]
        %v388 = vld [vmem:[%s269 + $0x158] sm:$0xff]
        %v389 = vld [vmem:[%s269 + $0x160] sm:$0xff]
        %v390 = vld [vmem:[%s269 + $0x168] sm:$0xff]
        %v391 = vld [vmem:[%s269 + $0x170] sm:$0xff]
        %v392 = vld [vmem:[%s269 + $0x178] sm:$0xff]
        %v393 = vld [vmem:[%s269 + $0x180] sm:$0xff]
        %v394 = vld [vmem:[%s269 + $0x188] sm:$0xff]
        %v395 = vld [vmem:[%s269 + $0x190] sm:$0xff]
        %v396 = vld [vmem:[%s269 + $0x198] sm:$0xff]
        %v397 = vld [vmem:[%s269 + $0x1a0] sm:$0xff]
        %v398 = vld [vmem:[%s269 + $0x1a8] sm:$0xff]
        %v399 = vld [vmem:[%s269 + $0x1b0] sm:$0xff]
        %v400 = vld [vmem:[%s269 + $0x1b8] sm:$0xff]
        %v401 = vld [vmem:[%s269 + $0x1c0] sm:$0xff]
        %v402 = vld [vmem:[%s269 + $0x1c8] sm:$0xff]
        %v403 = vld [vmem:[%s269 + $0x1d0] sm:$0xff]
        %v404 = vld [vmem:[%s269 + $0x1d8] sm:$0xff]
        %v405 = vld [vmem:[%s269 + $0x1e0] sm:$0xff]
        %v406 = vld [vmem:[%s269 + $0x1e8] sm:$0xff]
        %v407 = vld [vmem:[%s269 + $0x1f0] sm:$0xff]
        %v408 = vld [vmem:[%s269 + $0x1f8] sm:$0xff]
        %v409 = vld [vmem:[%s325] sm:$0xf]
        %v411 = vperm.slane %v409, 0
        %v412 = vperm.slane %v409, 1
        %v413 = vperm.slane %v409, 2
        %v414 = vperm.slane %v409, 3
        %v420 = vunpack.c.l.b16 %v344
        %v421 = vunpack.c.h.b16 %v344
        %v422 = vpack.c.b16 %v420, %v420
        %v423 = vpack.c.b16 %v421, %v421
        %v490 = vunpack.c.l.b16 %v345
        %v491 = vunpack.c.h.b16 %v345
        %v492 = vunpack.c.l.b16 %v346
        %v493 = vunpack.c.h.b16 %v346
        %v494 = vunpack.c.l.b16 %v347
        %v495 = vunpack.c.h.b16 %v347
        %v496 = vunpack.c.l.b16 %v348
        %v497 = vunpack.c.h.b16 %v348
        %v498 = vunpack.c.l.b16 %v349
        %v499 = vunpack.c.h.b16 %v349
        %v500 = vunpack.c.l.b16 %v350
        %v501 = vunpack.c.h.b16 %v350
        %v502 = vunpack.c.l.b16 %v351
        %v503 = vunpack.c.h.b16 %v351
        %v504 = vunpack.c.l.b16 %v352
        %v505 = vunpack.c.h.b16 %v352
        %v506 = vunpack.c.l.b16 %v353
        %v507 = vunpack.c.h.b16 %v353
        %v508 = vunpack.c.l.b16 %v354
        %v509 = vunpack.c.h.b16 %v354
        %v510 = vunpack.c.l.b16 %v355
        %v511 = vunpack.c.h.b16 %v355
        %v512 = vunpack.c.l.b16 %v356
        %v513 = vunpack.c.h.b16 %v356
        %v514 = vunpack.c.l.b16 %v357
        %v515 = vunpack.c.h.b16 %v357
        %v516 = vunpack.c.l.b16 %v358
        %v517 = vunpack.c.h.b16 %v358
        %v518 = vunpack.c.l.b16 %v359
        %v519 = vunpack.c.h.b16 %v359
        %v520 = vunpack.c.l.b16 %v360
        %v521 = vunpack.c.h.b16 %v360
        %v522 = vunpack.c.l.b16 %v361
        %v523 = vunpack.c.h.b16 %v361
        %v524 = vunpack.c.l.b16 %v362
        %v525 = vunpack.c.h.b16 %v362
        %v526 = vunpack.c.l.b16 %v363
        %v527 = vunpack.c.h.b16 %v363
        %v528 = vunpack.c.l.b16 %v364
        %v529 = vunpack.c.h.b16 %v364
        %v530 = vunpack.c.l.b16 %v365
        %v531 = vunpack.c.h.b16 %v365
        %v532 = vunpack.c.l.b16 %v366
        %v533 = vunpack.c.h.b16 %v366
        %v534 = vunpack.c.l.b16 %v367
        %v535 = vunpack.c.h.b16 %v367
        %v536 = vunpack.c.l.b16 %v368
        %v537 = vunpack.c.h.b16 %v368
        %v538 = vunpack.c.l.b16 %v369
        %v539 = vunpack.c.h.b16 %v369
        %v540 = vunpack.c.l.b16 %v370
        %v541 = vunpack.c.h.b16 %v370
        %v542 = vunpack.c.l.b16 %v371
        %v543 = vunpack.c.h.b16 %v371
        %v544 = vunpack.c.l.b16 %v372
        %v545 = vunpack.c.h.b16 %v372
        %v546 = vunpack.c.l.b16 %v373
        %v547 = vunpack.c.h.b16 %v373
        %v548 = vunpack.c.l.b16 %v374
        %v549 = vunpack.c.h.b16 %v374
        %v550 = vunpack.c.l.b16 %v375
        %v551 = vunpack.c.h.b16 %v375
        %v552 = vunpack.c.l.b16 %v376
        %v553 = vunpack.c.h.b16 %v376
        %v554 = vunpack.c.l.b16 %v377
        %v555 = vunpack.c.h.b16 %v377
        %v556 = vunpack.c.l.b16 %v378
        %v557 = vunpack.c.h.b16 %v378
        %v558 = vunpack.c.l.b16 %v379
        %v559 = vunpack.c.h.b16 %v379
        %v560 = vunpack.c.l.b16 %v380
        %v561 = vunpack.c.h.b16 %v380
        %v562 = vunpack.c.l.b16 %v381
        %v563 = vunpack.c.h.b16 %v381
        %v564 = vunpack.c.l.b16 %v382
        %v565 = vunpack.c.h.b16 %v382
        %v566 = vunpack.c.l.b16 %v383
        %v567 = vunpack.c.h.b16 %v383
        %v568 = vunpack.c.l.b16 %v384
        %v569 = vunpack.c.h.b16 %v384
        %v570 = vunpack.c.l.b16 %v385
        %v571 = vunpack.c.h.b16 %v385
        %v572 = vunpack.c.l.b16 %v386
        %v573 = vunpack.c.h.b16 %v386
        %v574 = vunpack.c.l.b16 %v387
        %v575 = vunpack.c.h.b16 %v387
        %v576 = vunpack.c.l.b16 %v388
        %v577 = vunpack.c.h.b16 %v388
        %v578 = vunpack.c.l.b16 %v389
        %v579 = vunpack.c.h.b16 %v389
        %v580 = vunpack.c.l.b16 %v390
        %v581 = vunpack.c.h.b16 %v390
        %v582 = vunpack.c.l.b16 %v391
        %v583 = vunpack.c.h.b16 %v391
        %v584 = vunpack.c.l.b16 %v392
        %v585 = vunpack.c.h.b16 %v392
        %v586 = vunpack.c.l.b16 %v393
        %v587 = vunpack.c.h.b16 %v393
        %v588 = vunpack.c.l.b16 %v394
        %v589 = vunpack.c.h.b16 %v394
        %v590 = vunpack.c.l.b16 %v395
        %v591 = vunpack.c.h.b16 %v395
        %v592 = vunpack.c.l.b16 %v396
        %v593 = vunpack.c.h.b16 %v396
        %v594 = vunpack.c.l.b16 %v397
        %v595 = vunpack.c.h.b16 %v397
        %v596 = vunpack.c.l.b16 %v398
        %v597 = vunpack.c.h.b16 %v398
        %v598 = vunpack.c.l.b16 %v399
        %v599 = vunpack.c.h.b16 %v399
        %v600 = vunpack.c.l.b16 %v400
        %v601 = vunpack.c.h.b16 %v400
        %v602 = vunpack.c.l.b16 %v401
        %v603 = vunpack.c.h.b16 %v401
        %v604 = vunpack.c.l.b16 %v402
        %v605 = vunpack.c.h.b16 %v402
        %v606 = vunpack.c.l.b16 %v403
        %v607 = vunpack.c.h.b16 %v403
        %v608 = vunpack.c.l.b16 %v404
        %v609 = vunpack.c.h.b16 %v404
        %v610 = vunpack.c.l.b16 %v405
        %v611 = vunpack.c.h.b16 %v405
        %v612 = vunpack.c.l.b16 %v406
        %v613 = vunpack.c.h.b16 %v406
        %v614 = vunpack.c.l.b16 %v407
        %v615 = vunpack.c.h.b16 %v407
        %v616 = vunpack.c.l.b16 %v408
        %v617 = vunpack.c.h.b16 %v408
        %v618 = vpack.c.b16 %v494, %v490
        %v619 = vpack.c.b16 %v495, %v491
        %v620 = vpack.c.b16 %v496, %v492
        %v621 = vpack.c.b16 %v497, %v493
        %v622 = vpack.c.b16 %v502, %v498
        %v623 = vpack.c.b16 %v503, %v499
        %v624 = vpack.c.b16 %v504, %v500
        %v625 = vpack.c.b16 %v505, %v501
        %v626 = vpack.c.b16 %v510, %v506
        %v627 = vpack.c.b16 %v511, %v507
        %v628 = vpack.c.b16 %v512, %v508
        %v629 = vpack.c.b16 %v513, %v509
        %v630 = vpack.c.b16 %v518, %v514
        %v631 = vpack.c.b16 %v519, %v515
        %v632 = vpack.c.b16 %v520, %v516
        %v633 = vpack.c.b16 %v521, %v517
        %v634 = vpack.c.b16 %v526, %v522
        %v635 = vpack.c.b16 %v527, %v523
        %v636 = vpack.c.b16 %v528, %v524
        %v637 = vpack.c.b16 %v529, %v525
        %v638 = vpack.c.b16 %v534, %v530
        %v639 = vpack.c.b16 %v535, %v531
        %v640 = vpack.c.b16 %v536, %v532
        %v641 = vpack.c.b16 %v537, %v533
        %v642 = vpack.c.b16 %v542, %v538
        %v643 = vpack.c.b16 %v543, %v539
        %v644 = vpack.c.b16 %v544, %v540
        %v645 = vpack.c.b16 %v545, %v541
        %v646 = vpack.c.b16 %v550, %v546
        %v647 = vpack.c.b16 %v551, %v547
        %v648 = vpack.c.b16 %v552, %v548
        %v649 = vpack.c.b16 %v553, %v549
        %v650 = vpack.c.b16 %v558, %v554
        %v651 = vpack.c.b16 %v559, %v555
        %v652 = vpack.c.b16 %v560, %v556
        %v653 = vpack.c.b16 %v561, %v557
        %v654 = vpack.c.b16 %v566, %v562
        %v655 = vpack.c.b16 %v567, %v563
        %v656 = vpack.c.b16 %v568, %v564
        %v657 = vpack.c.b16 %v569, %v565
        %v658 = vpack.c.b16 %v574, %v570
        %v659 = vpack.c.b16 %v575, %v571
        %v660 = vpack.c.b16 %v576, %v572
        %v661 = vpack.c.b16 %v577, %v573
        %v662 = vpack.c.b16 %v582, %v578
        %v663 = vpack.c.b16 %v583, %v579
        %v664 = vpack.c.b16 %v584, %v580
        %v665 = vpack.c.b16 %v585, %v581
        %v666 = vpack.c.b16 %v590, %v586
        %v667 = vpack.c.b16 %v591, %v587
        %v668 = vpack.c.b16 %v592, %v588
        %v669 = vpack.c.b16 %v593, %v589
        %v670 = vpack.c.b16 %v598, %v594
        %v671 = vpack.c.b16 %v599, %v595
        %v672 = vpack.c.b16 %v600, %v596
        %v673 = vpack.c.b16 %v601, %v597
        %v674 = vpack.c.b16 %v606, %v602
        %v675 = vpack.c.b16 %v607, %v603
        %v676 = vpack.c.b16 %v608, %v604
        %v677 = vpack.c.b16 %v609, %v605
        %v678 = vpack.c.b16 %v614, %v610
        %v679 = vpack.c.b16 %v615, %v611
        %v680 = vpack.c.b16 %v616, %v612
        %v681 = vpack.c.b16 %v617, %v613
        %746 = vmatpush.bf16.msra.mxu0 %v646
        %747 = vmatpush.bf16.msra.mxu0 %v642
        %748 = vmatpush.bf16.msra.mxu0 %v638
        %749 = vmatpush.bf16.msra.mxu0 %v634
        %750 = vmatpush.bf16.msra.mxu0 %v630
        %751 = vmatpush.bf16.msra.mxu0 %v626
        %752 = vmatpush.bf16.msra.mxu0 %v622
        %753 = vmatpush.bf16.msra.mxu0 %v618
        %754 = vmatmul.bf16.gmra.mxu0 %v422
        %v755 = vpop.f32.mrf.mxu0
        %v756 = vadd.f32 %v411, %v755
        %v757 = vpop.f32.mrf.mxu0
        %758 = vdwg.mxu0
        %759 = vmatpush.bf16.msra.mxu0 %v678
        %760 = vmatpush.bf16.msra.mxu0 %v674
        %761 = vmatpush.bf16.msra.mxu0 %v670
        %762 = vmatpush.bf16.msra.mxu0 %v666
        %763 = vmatpush.bf16.msra.mxu0 %v662
        %764 = vmatpush.bf16.msra.mxu0 %v658
        %765 = vmatpush.bf16.msra.mxu0 %v654
        %766 = vmatpush.bf16.msra.mxu0 %v650
        %767 = vmatmul.bf16.gmra.mxu0 %v423
        %v768 = vpop.f32.mrf.mxu0
        %v769 = vadd.f32 %v756, %v768
        %v770 = vpop.f32.mrf.mxu0
        %771 = vdwg.mxu0
        %772 = vmatpush.bf16.msra.mxu0 %v647
        %773 = vmatpush.bf16.msra.mxu0 %v643
        %774 = vmatpush.bf16.msra.mxu0 %v639
        %775 = vmatpush.bf16.msra.mxu0 %v635
        %776 = vmatpush.bf16.msra.mxu0 %v631
        %777 = vmatpush.bf16.msra.mxu0 %v627
        %778 = vmatpush.bf16.msra.mxu0 %v623
        %779 = vmatpush.bf16.msra.mxu0 %v619
        %780 = vmatmul.bf16.gmra.mxu0 %v422
        %v781 = vpop.f32.mrf.mxu0
        %v782 = vadd.f32 %v412, %v781
        %v783 = vpop.f32.mrf.mxu0
        %784 = vdwg.mxu0
        %785 = vmatpush.bf16.msra.mxu0 %v679
        %786 = vmatpush.bf16.msra.mxu0 %v675
        %787 = vmatpush.bf16.msra.mxu0 %v671
        %788 = vmatpush.bf16.msra.mxu0 %v667
        %789 = vmatpush.bf16.msra.mxu0 %v663
        %790 = vmatpush.bf16.msra.mxu0 %v659
        %791 = vmatpush.bf16.msra.mxu0 %v655
        %792 = vmatpush.bf16.msra.mxu0 %v651
        %793 = vmatmul.bf16.gmra.mxu0 %v423
        %v794 = vpop.f32.mrf.mxu0
        %v795 = vadd.f32 %v782, %v794
        %v796 = vpop.f32.mrf.mxu0
        %797 = vdwg.mxu0
        %798 = vmatpush.bf16.msra.mxu0 %v648
        %799 = vmatpush.bf16.msra.mxu0 %v644
        %800 = vmatpush.bf16.msra.mxu0 %v640
        %801 = vmatpush.bf16.msra.mxu0 %v636
        %802 = vmatpush.bf16.msra.mxu0 %v632
        %803 = vmatpush.bf16.msra.mxu0 %v628
        %804 = vmatpush.bf16.msra.mxu0 %v624
        %805 = vmatpush.bf16.msra.mxu0 %v620
        %806 = vmatmul.bf16.gmra.mxu0 %v422
        %v807 = vpop.f32.mrf.mxu0
        %v808 = vadd.f32 %v413, %v807
        %v809 = vpop.f32.mrf.mxu0
        %810 = vdwg.mxu0
        %811 = vmatpush.bf16.msra.mxu0 %v680
        %812 = vmatpush.bf16.msra.mxu0 %v676
        %813 = vmatpush.bf16.msra.mxu0 %v672
        %814 = vmatpush.bf16.msra.mxu0 %v668
        %815 = vmatpush.bf16.msra.mxu0 %v664
        %816 = vmatpush.bf16.msra.mxu0 %v660
        %817 = vmatpush.bf16.msra.mxu0 %v656
        %818 = vmatpush.bf16.msra.mxu0 %v652
        %819 = vmatmul.bf16.gmra.mxu0 %v423
        %v820 = vpop.f32.mrf.mxu0
        %v821 = vadd.f32 %v808, %v820
        %v822 = vpop.f32.mrf.mxu0
        %823 = vdwg.mxu0
        %824 = vmatpush.bf16.msra.mxu0 %v649
        %825 = vmatpush.bf16.msra.mxu0 %v645
        %826 = vmatpush.bf16.msra.mxu0 %v641
        %827 = vmatpush.bf16.msra.mxu0 %v637
        %828 = vmatpush.bf16.msra.mxu0 %v633
        %829 = vmatpush.bf16.msra.mxu0 %v629
        %830 = vmatpush.bf16.msra.mxu0 %v625
        %831 = vmatpush.bf16.msra.mxu0 %v621
        %832 = vmatmul.bf16.gmra.mxu0 %v422
        %v833 = vpop.f32.mrf.mxu0
        %v834 = vadd.f32 %v414, %v833
        %v835 = vpop.f32.mrf.mxu0
        %836 = vdwg.mxu0
        %837 = vmatpush.bf16.msra.mxu0 %v681
        %838 = vmatpush.bf16.msra.mxu0 %v677
        %839 = vmatpush.bf16.msra.mxu0 %v673
        %840 = vmatpush.bf16.msra.mxu0 %v669
        %841 = vmatpush.bf16.msra.mxu0 %v665
        %842 = vmatpush.bf16.msra.mxu0 %v661
        %843 = vmatpush.bf16.msra.mxu0 %v657
        %844 = vmatpush.bf16.msra.mxu0 %v653
        %845 = vmatmul.bf16.gmra.mxu0 %v423
        %v846 = vpop.f32.mrf.mxu0
        %v847 = vadd.f32 %v834, %v846
        %v848 = vpop.f32.mrf.mxu0
        %849 = vdwg.mxu0
        %v850 = vxor.u32 %v769, 2147483648
        %v851 = vmul.f32 %v850, 1.442695
        %v852 = vpow.pop %v851
        %v853 = vadd.f32 %v852, 1.0
        %v854 = vrcp.pop %v853
        %v855 = vmul.f32 %v853, %v854
        %v856 = vsub.f32 1.0, %v855
        %v857 = vmul.f32 %v854, %v856
        %v858 = vadd.f32 %v854, %v857
        %vm859 = vweird.f32 %v853
        %vm860 = vweird.f32 %v854
        %vm861 = vmor %vm859, %vm860
        %v862 = vsel %vm861, %v854, %v858
        %v863 = vand.u32 2147483647, %v853
        %vm864 = vcmp.eq.f32.partialorder %v863, 8.507059e+37
        %v865 = vand.u32 %v853, 2147483648
        %v866 = vor.u32 1.1754944e-38, %v865
        %v867 = vsel %vm864, %v866, %v862
        %v868 = vmul.f32 1.0, %v867
        %v869 = vxor.u32 %v795, 2147483648
        %v870 = vmul.f32 %v869, 1.442695
        %v871 = vpow.pop %v870
        %v872 = vadd.f32 %v871, 1.0
        %v873 = vrcp.pop %v872
        %v874 = vmul.f32 %v872, %v873
        %v875 = vsub.f32 1.0, %v874
        %v876 = vmul.f32 %v873, %v875
        %v877 = vadd.f32 %v873, %v876
        %vm878 = vweird.f32 %v872
        %vm879 = vweird.f32 %v873
        %vm880 = vmor %vm878, %vm879
        %v881 = vsel %vm880, %v873, %v877
        %v882 = vand.u32 2147483647, %v872
        %vm883 = vcmp.eq.f32.partialorder %v882, 8.507059e+37
        %v884 = vand.u32 %v872, 2147483648
        %v885 = vor.u32 1.1754944e-38, %v884
        %v886 = vsel %vm883, %v885, %v881
        %v887 = vmul.f32 1.0, %v886
        %v888 = vtanh.pop %v821
        %v889 = vxor.u32 %v847, 2147483648
        %v890 = vmul.f32 %v889, 1.442695
        %v891 = vpow.pop %v890
        %v892 = vadd.f32 %v891, 1.0
        %v893 = vrcp.pop %v892
        %v894 = vmul.f32 %v892, %v893
        %v895 = vsub.f32 1.0, %v894
        %v896 = vmul.f32 %v893, %v895
        %v897 = vadd.f32 %v893, %v896
        %vm898 = vweird.f32 %v892
        %vm899 = vweird.f32 %v893
        %vm900 = vmor %vm898, %vm899
        %v901 = vsel %vm900, %v893, %v897
        %v902 = vand.u32 2147483647, %v892
        %vm903 = vcmp.eq.f32.partialorder %v902, 8.507059e+37
        %v904 = vand.u32 %v892, 2147483648
        %v905 = vor.u32 1.1754944e-38, %v904
        %v906 = vsel %vm903, %v905, %v901
        %v907 = vmul.f32 1.0, %v906
        %v908 = vld [vmem:[%s321] sm:$0xff]
        %v909 = vmul.f32 %v887, %v908
        %v910 = vmul.f32 %v868, %v888
        %v911 = vadd.f32 %v909, %v910
        %v912 = vtanh.pop %v911
        %v913 = vmul.f32 %v907, %v912
        %914 = vst [vmem:[%s329] sm:$0xff] %v913
        %915 = vst [vmem:[%s333] sm:$0xff] %v911
        %s916 = sadd.s32 %s21, 1
        %p917 = scmp.lt.s32.totalorder %s916, 3
        // Predicated region
        $region49: #{_forward.1} parent=39 // pred_check
          %p918 = pneg %p917
        $region50: #{_forward.1} parent=39 // pred_check_branch
          %920 = sbr.rel (%p918) target = $region52
        $region51: #{_forward.1} parent=39 // pred_region
          %v921 = vpack.c.bf16 %v913, %v913
          %922 = vst [vmem:[#allocation2] sm:$0xf] %v921
        $region52: #{_forward.1} parent=39 // pred_fallthru
          _
        %p923 = scmp.lt.s32.totalorder %s21, 2
        %s924 = scalar_select %p923, %s21, 2
        %s925 = smul.addr %s924, 8
        %s926 = scalar_lea.vmem %s5, %s925
        %p927 = scmp.lt.s32.totalorder %s21, 2
        %s928 = scalar_select %p927, %s21, 2
        %s929 = smul.addr %s928, 8
        %s930 = scalar_lea.vmem %s6, %s929
        // Predicated region
        $region53: #{_forward.1} parent=39 // pred_check
          %p931 = pneg %p164
        $region54: #{_forward.1} parent=39 // pred_check_branch
          %933 = sbr.rel (%p931) target = $region56
        $region55: #{_forward.1} parent=39 // pred_region
          _
        $region56: #{_forward.1} parent=39 // pred_fallthru
          _
        // Predicated region
        $region57: #{_forward.1} parent=39 // pred_check
          %p934 = pneg %p190
        $region58: #{_forward.1} parent=39 // pred_check_branch
          %936 = sbr.rel (%p934) target = $region60
        $region59: #{_forward.1} parent=39 // pred_region
          _
        $region60: #{_forward.1} parent=39 // pred_fallthru
          _
      $region40: #{_forward.1} parent=5 // pred_fallthru
        _
      %p937 = scmp.le.s32.totalorder 2, %s16
      // Predicated region
      $region61: #{_forward.1} parent=5 // pred_check
        %p938 = pneg %p937
      $region62: #{_forward.1} parent=5 // pred_check_branch
        %940 = sbr.rel (%p938) target = $region64
      $region63: #{_forward.1} parent=5 // pred_region
        %s941 = ssub.s32 %s16, 2
        // Predicated region
        $region65: #{_forward.1} parent=63 // pred_check
          %p942 = pneg %p170
        $region66: #{_forward.1} parent=63 // pred_check_branch
          %944 = sbr.rel (%p942) target = $region68
        $region67: #{_forward.1} parent=63 // pred_region
          %p945 = scmp.lt.s32.totalorder %s22, 2
          %s946 = scalar_select %p945, %s22, 2
          %s947 = smul.addr %s946, 8
          %s948 = scalar_lea.vmem %s5, %s947
        $region68: #{_forward.1} parent=63 // pred_fallthru
          _
        // Predicated region
        $region69: #{_forward.1} parent=63 // pred_check
          %p949 = pneg %p196
        $region70: #{_forward.1} parent=63 // pred_check_branch
          %951 = sbr.rel (%p949) target = $region72
        $region71: #{_forward.1} parent=63 // pred_region
          %p952 = scmp.lt.s32.totalorder %s22, 2
          %s953 = scalar_select %p952, %s22, 2
          %s954 = smul.addr %s953, 8
          %s955 = scalar_lea.vmem %s6, %s954
        $region72: #{_forward.1} parent=63 // pred_fallthru
          _
      $region64: #{_forward.1} parent=5 // pred_fallthru
        _
    $region6: #{_forward.1} parent=1 // loop_footer
      %s20 = sadd.s32 1, %s16
    $region7: #{_forward.1} parent=1 // loop_footer_branch
      %15 = sbr.rel target = $region3
    $region8: #{_forward.1} parent=1 // loop_exit
      _
    %956 = vsyncpa [#allocation4], 1
    %s957 = scalar_lea.sflag [#allocation4], 1
    %958 = vsyncpa %s957, 1

</llo_original>
